<compile_context>
chip_gen: v7x
topology: tpu7x:2x2x1
jax: 0.10.0
libtpu: 0.0.40
codegen_flags: <defaults>
</compile_context>

<pallas_src>
import math

import jax
import jax.numpy as jnp
from jax import lax
from jax.experimental import pallas as pl
from jax.experimental.pallas import tpu as pltpu

NUM_STUDENTS = 5  # matches the 5 alpha_i parameters in the module


# ----------------------------------------------------------------------------
# Helpers
# ----------------------------------------------------------------------------
def _round_up(x, m):
    return ((x + m - 1) // m) * m


def _vmem_capacity_bytes():
    try:
        return int(pltpu.get_tpu_info().vmem_capacity_bytes)
    except Exception:
        return 64 << 20  # conservative fallback (v7x-sized)


def _tile_caps():
    cap = _vmem_capacity_bytes()
    if cap >= (100 << 20):  # v5e / v6e: 128 MiB physical VMEM
        return dict(tm=1024, tn=1024, tk=2048, vmem=cap - (24 << 20))
    # v7x: 64 MiB physical VMEM
    return dict(tm=512, tn=512, tk=2048, vmem=cap - (8 << 20))


# ----------------------------------------------------------------------------
# Kernel
# ----------------------------------------------------------------------------
def teacher_lora_kernel(x_ref,     # VMEM (tm, tk)   compute dtype
                        w_ref,     # VMEM (tn, tk)   compute dtype, PyTorch (out, in) layout
                        b_ref,     # VMEM (1, tn)    f32
                        down_ref,  # VMEM (tm, 5r)   compute dtype, gains already applied
                        wu_ref,    # VMEM (tn, 5r)   compute dtype, unscaled
                        o_ref,     # VMEM (tm, tn)   output dtype
                        acc_ref):  # VMEM (tm, tn)   f32 accumulator scratch
    k = pl.program_id(2)
    # Contract last dim vs last dim -> (out, in)-layout weight needs no HBM/VMEM transpose.
    nt = (((1,), (1,)), ((), ()))

    @pl.when(k == 0)
    def _():
        acc_ref[...] = jnp.zeros_like(acc_ref)

    # Frozen original linear layer, f32 accumulation on the MXU.
    acc_ref[...] += lax.dot_general(x_ref[...], w_ref[...], dimension_numbers=nt,
                                    preferred_element_type=jnp.float32)

    @pl.when(k == pl.num_programs(2) - 1)
    def _():
        # Tiny K=5r up-projection of the (pre-scaled) down activations, then bias + add.
        lora = lax.dot_general(down_ref[...], wu_ref[...], dimension_numbers=nt,
                               preferred_element_type=jnp.float32)
        o_ref[...] = (acc_ref[...] + b_ref[...] + lora).astype(o_ref.dtype)


# ----------------------------------------------------------------------------
# One-time weight preparation (frozen eval weights -> call once, not per forward)
# ----------------------------------------------------------------------------
def prepare_teacher_lora_weights(w_org, b_org, wd_stack, wu_stack, *,
                                 lora_dim=None, compute_dtype=jnp.bfloat16):
    """w_org: (out, in). b_org: (out,). wd_stack: (5, r, in). wu_stack: (5, out, r)."""
    out_dim, in_dim = w_org.shape
    n_students, r, in_dim_d = wd_stack.shape
    if in_dim_d != in_dim or wu_stack.shape != (n_students, out_dim, r):
        raise ValueError("inconsistent LoRA weight shapes")
    if lora_dim is not None and lora_dim != r:
        raise ValueError(f"lora_dim={lora_dim} does not match wd_stack rank {r}")
    r5 = n_students * r

    caps = _tile_caps()

    # K (in_dim) tiling: single block when it fits, else 128-aligned tiles + zero pad.
    if in_dim <= caps["tk"]:
        tk, in_dim_p = in_dim, in_dim
    else:
        tk = caps["tk"]
        in_dim_p = _round_up(in_dim, tk)

    out_dim_p = _round_up(out_dim, 128)  # lane-dense, unmasked output stores

    w = w_org
    b = b_org.reshape(1, out_dim).astype(jnp.float32)
    wu_cat = jnp.transpose(wu_stack, (1, 0, 2)).reshape(out_dim, r5)  # (out, 5r), unscaled
    if out_dim_p != out_dim:
        w = jnp.pad(w, ((0, out_dim_p - out_dim), (0, 0)))
        b = jnp.pad(b, ((0, 0), (0, out_dim_p - out_dim)))
        wu_cat = jnp.pad(wu_cat, ((0, out_dim_p - out_dim), (0, 0)))
    if in_dim_p != in_dim:
        w = jnp.pad(w, ((0, 0), (0, in_dim_p - in_dim)))

    return dict(
        w=w.astype(compute_dtype),                                   # (out_p, in_p)
        b=b,                                                         # (1, out_p) f32
        wd_cat=wd_stack.reshape(r5, in_dim).astype(compute_dtype),   # (5r, in)
        wu_cat=wu_cat.astype(compute_dtype),                         # (out_p, 5r)
        out_dim=out_dim, out_dim_p=out_dim_p,
        in_dim=in_dim, in_dim_p=in_dim_p,
        r=r, r5=r5, tk=tk,
        compute_dtype=compute_dtype, caps=caps,
    )


# ----------------------------------------------------------------------------
# Forward
# ----------------------------------------------------------------------------
def teacher_lora_forward(x, prepared, alphas, *, multiplier=1.0, lora_alpha=1.0,
                         tm=None, tn=None):
    p = prepared
    compute_dtype = p["compute_dtype"]
    in_dim, in_dim_p = p["in_dim"], p["in_dim_p"]
    out_dim, out_dim_p = p["out_dim"], p["out_dim_p"]
    r, r5, tk = p["r"], p["r5"], p["tk"]
    caps = p["caps"]

    if x.shape[-1] != in_dim:
        raise ValueError("x last dim does not match prepared weights")
    if alphas.shape[0] * r != r5:
        raise ValueError("alphas do not match the number of student branches")

    lead_shape = x.shape[:-1]
    M = math.prod(lead_shape)
    x2 = x.reshape(M, in_dim).astype(compute_dtype)

    # ---- Rank-5r down-projection hoisted out of the kernel's N loop (tiny: (M, 20)). ----
    nt = (((1,), (1,)), ((), ()))
    down = lax.dot_general(x2, p["wd_cat"], dimension_numbers=nt,
                           preferred_element_type=jnp.float32)            # (M, 5r) f32
    scale = lora_alpha / r                                                 # alpha / lora_dim
    gain = alphas.astype(jnp.float32) * jnp.float32(multiplier * scale)    # (5,)
    down = (down * jnp.repeat(gain, r)[None, :]).astype(compute_dtype)     # gains applied in f32

    # ---- M tiling: pad rows to an aligned size (never fall back to tm=M for huge M). ----
    if tm is None:
        if M <= caps["tm"]:
            M_p = _round_up(max(M, 8), 8)
            tm = M_p
        else:
            M_p = _round_up(M, 128)
            tm = next(t for t in range(caps["tm"], 7, -8) if M_p % t == 0)
    else:
        M_p = _round_up(M, tm)
    if tn is None:
        tn = next(t for t in range(min(caps["tn"], out_dim_p), 0, -128)
                  if out_dim_p % t == 0)

    if M_p != M or in_dim_p != in_dim:
        x2 = jnp.pad(x2, ((0, M_p - M), (0, in_dim_p - in_dim)))
    if M_p != M:
        down = jnp.pad(down, ((0, M_p - M), (0, 0)))

    # Grid (N, M, K): N outermost so W_org / Wu / bias blocks are invariant over the inner
    # M loop (weight streamed from HBM once when K fits a single block); K innermost
    # (reduction) with an f32 accumulator scratch.
    grid = (out_dim_p // tn, M_p // tm, in_dim_p // tk)

    # ---- VMEM budget: actual double-buffered footprint + headroom, per-generation cap. ----
    cb = jnp.dtype(compute_dtype).itemsize
    ob = jnp.dtype(x.dtype).itemsize
    need = (2 * tm * tk * cb          # x tile (double-buffered)
            + 2 * tn * tk * cb        # W_org tile
            + 2 * tn * 4              # bias tile (f32)
            + 2 * tm * r5 * cb        # down tile
            + 2 * tn * r5 * cb        # Wu tile
            + 2 * tm * tn * ob        # output tile
            + tm * tn * 4)            # f32 accumulator scratch
    vmem_limit = int(min(max(need + (4 << 20), 32 << 20), caps["vmem"]))

    out = pl.pallas_call(
        teacher_lora_kernel,
        out_shape=jax.ShapeDtypeStruct((M_p, out_dim_p), x.dtype),
        grid_spec=pltpu.PrefetchScalarGridSpec(
            num_scalar_prefetch=0,
            grid=grid,
            in_specs=[
                pl.BlockSpec((tm, tk), lambda j, i, k: (i, k)),    # x
                pl.BlockSpec((tn, tk), lambda j, i, k: (j, k)),    # W_org (out, in), N-tiled
                pl.BlockSpec((1, tn), lambda j, i, k: (0, j)),     # bias
                pl.BlockSpec((tm, r5), lambda j, i, k: (i, 0)),    # down (gain-folded)
                pl.BlockSpec((tn, r5), lambda j, i, k: (j, 0)),    # Wu_cat
            ],
            out_specs=pl.BlockSpec((tm, tn), lambda j, i, k: (i, j)),
            scratch_shapes=[pltpu.VMEM((tm, tn), jnp.float32)],
        ),
        compiler_params=pltpu.CompilerParams(
            dimension_semantics=("parallel", "arbitrary", "arbitrary"),
            vmem_limit_bytes=vmem_limit,
        ),
    )(x2, p["w"], p["b"], down, p["wu_cat"])

    out = out[:M, :out_dim]
    return out.reshape(*lead_shape, out_dim)


# ----------------------------------------------------------------------------
# Pure-JAX reference (mirrors the PyTorch forward, eval mode)
# ----------------------------------------------------------------------------
def ref_forward(x, w_org, b_org, wd_stack, wu_stack, alphas, multiplier, scale):
    org = jnp.einsum("...i,oi->...o", x, w_org) + b_org
    val = jnp.zeros_like(org)
    for i in range(wd_stack.shape[0]):
        down = jnp.einsum("...i,ri->...r", x, wd_stack[i])
        up = jnp.einsum("...r,or->...o", down, wu_stack[i])
        val = val + alphas[i] * up
    return org + val * multiplier * scale


if __name__ == "__main__":
    # Small shapes consistent with a Linear org_module: batch=2, seq=8, hidden=32.
    B, S, IN_DIM, OUT_DIM = 2, 8, 32, 32
    LORA_DIM = 4
    LORA_ALPHA = 1.0
    MULTIPLIER = 1.0

    key = jax.random.PRNGKey(0)
    kx, kw, kb, kd, ku = jax.random.split(key, 5)

    x = jax.random.normal(kx, (B, S, IN_DIM), dtype=jnp.float32)
    w_org = jax.random.normal(kw, (OUT_DIM, IN_DIM), dtype=jnp.float32) * 0.1
    b_org = jax.random.normal(kb, (OUT_DIM,), dtype=jnp.float32) * 0.1
    # Student LoRA weights (pre-trained elsewhere; random & non-zero so the path is exercised).
    wd_stack = jax.random.normal(kd, (NUM_STUDENTS, LORA_DIM, IN_DIM), dtype=jnp.float32) * 0.1
    wu_stack = jax.random.normal(ku, (NUM_STUDENTS, OUT_DIM, LORA_DIM), dtype=jnp.float32) * 0.1
    # alpha_1..alpha_5 are nn.Parameter(1.0) at init.
    alphas = jnp.ones((NUM_STUDENTS,), dtype=jnp.float32)

    ref = ref_forward(x, w_org, b_org, wd_stack, wu_stack, alphas,
                      MULTIPLIER, LORA_ALPHA / LORA_DIM)

    # 1) f32 compute path: tight check against the f32 reference.
    prep_f32 = prepare_teacher_lora_weights(w_org, b_org, wd_stack, wu_stack,
                                            lora_dim=LORA_DIM, compute_dtype=jnp.float32)
    out_f32 = teacher_lora_forward(x, prep_f32, alphas,
                                   multiplier=MULTIPLIER, lora_alpha=LORA_ALPHA)
    out_f32 = jax.block_until_ready(out_f32)
    assert out_f32.shape == (B, S, OUT_DIM)
    assert jnp.allclose(out_f32, ref, atol=1e-4, rtol=1e-4), "f32 path mismatch vs reference"

    # 2) default bf16-compute / f32-accumulate path: looser tolerance (bf16 operands — this is
    #    a deliberate precision trade vs the f32 PyTorch module; use compute_dtype=f32 if not).
    prep_bf16 = prepare_teacher_lora_weights(w_org, b_org, wd_stack, wu_stack,
                                             lora_dim=LORA_DIM)
    out_bf16 = teacher_lora_forward(x, prep_bf16, alphas,
                                    multiplier=MULTIPLIER, lora_alpha=LORA_ALPHA)
    out_bf16 = jax.block_until_ready(out_bf16)
    assert out_bf16.shape == (B, S, OUT_DIM)
    assert jnp.allclose(out_bf16, ref, atol=5e-2, rtol=5e-2), "bf16 path mismatch vs reference"

    # TODO(synk): Conv2d org_module branch (is_linear=False) and training-time dropout /
    # rank_dropout / module_dropout paths are not implemented (eval-mode Linear path only).
    print("KERNEL_OK")
</pallas_src>

<mosaic_0001>
module attributes {stable_mosaic.version = 11 : i64} {
  func.func @teacher_lora_kernel(%arg0: i32, %arg1: i32, %arg2: i32, %arg3: memref<16x32xf32, #tpu.memory_space<vmem>>, %arg4: memref<128x32xf32, #tpu.memory_space<vmem>>, %arg5: memref<1x128xf32, #tpu.memory_space<vmem>>, %arg6: memref<16x20xf32, #tpu.memory_space<vmem>>, %arg7: memref<128x20xf32, #tpu.memory_space<vmem>>, %arg8: memref<16x128xf32, #tpu.memory_space<vmem>>, %arg9: memref<16x128xf32, #tpu.memory_space<vmem>>) attributes {dimension_semantics = [#tpu.dimension_semantics<parallel>, #tpu.dimension_semantics<arbitrary>, #tpu.dimension_semantics<arbitrary>], iteration_bounds = array<i64: 1, 1, 1>, scalar_prefetch = 0 : i64, scratch_operands = 1 : i64, tpu.core_type = #tpu.core_type<tc>, window_params = [{transform_indices = @transform_0, window_bounds = array<i64: 16, 32>}, {transform_indices = @transform_1, window_bounds = array<i64: 128, 32>}, {transform_indices = @transform_2, window_bounds = array<i64: 1, 128>}, {transform_indices = @transform_3, window_bounds = array<i64: 16, 20>}, {transform_indices = @transform_4, window_bounds = array<i64: 128, 20>}, {transform_indices = @transform_5, window_bounds = array<i64: 16, 128>}]} {
    %c0_i32 = arith.constant 0 : i32
    %0 = arith.cmpi eq, %arg2, %c0_i32 : i32
    %1 = arith.extui %0 : i1 to i32
    %c0_i32_0 = arith.constant 0 : i32
    %2 = arith.cmpi ne, %1, %c0_i32_0 : i32
    scf.if %2 {
      %cst_10 = arith.constant 0.000000e+00 : f32
      %12 = vector.broadcast %cst_10 : f32 to vector<16x128xf32>
      %c0_11 = arith.constant 0 : index
      %c0_12 = arith.constant 0 : index
      %13 = vector.load %arg9[%c0_11, %c0_12] : memref<16x128xf32, #tpu.memory_space<vmem>>, vector<16x128xf32>
      tpu.vector_store %arg9[%c0_11, %c0_12], %12 {strides = array<i32>} : memref<16x128xf32, #tpu.memory_space<vmem>>, vector<16x128xf32>,
    } else {
    }
    %c0 = arith.constant 0 : index
    %c0_1 = arith.constant 0 : index
    %3 = vector.load %arg9[%c0, %c0_1] : memref<16x128xf32, #tpu.memory_space<vmem>>, vector<16x128xf32>
    %c0_2 = arith.constant 0 : index
    %c0_3 = arith.constant 0 : index
    %4 = vector.load %arg3[%c0_2, %c0_3] : memref<16x32xf32, #tpu.memory_space<vmem>>, vector<16x32xf32>
    %c0_4 = arith.constant 0 : index
    %c0_5 = arith.constant 0 : index
    %5 = vector.load %arg4[%c0_4, %c0_5] : memref<128x32xf32, #tpu.memory_space<vmem>>, vector<128x32xf32>
    %cst = arith.constant dense<0.000000e+00> : vector<16x128xf32>
    %6 = tpu.matmul %4, %5, %cst {dimension_numbers = #tpu.dot_dimension_numbers<[1], [1], [0], [0], [0, 0, 1, 0], [], []>} : vector<16x32xf32>, vector<128x32xf32>, vector<16x128xf32> -> vector<16x128xf32>
    %7 = arith.addf %3, %6 : vector<16x128xf32>
    %c0_6 = arith.constant 0 : index
    %c0_7 = arith.constant 0 : index
    %8 = vector.load %arg9[%c0_6, %c0_7] : memref<16x128xf32, #tpu.memory_space<vmem>>, vector<16x128xf32>
    tpu.vector_store %arg9[%c0_6, %c0_7], %7 {strides = array<i32>} : memref<16x128xf32, #tpu.memory_space<vmem>>, vector<16x128xf32>,
    %c0_i32_8 = arith.constant 0 : i32
    %9 = arith.cmpi eq, %arg2, %c0_i32_8 : i32
    %10 = arith.extui %9 : i1 to i32
    %c0_i32_9 = arith.constant 0 : i32
    %11 = arith.cmpi ne, %10, %c0_i32_9 : i32
    scf.if %11 {
      %c0_10 = arith.constant 0 : index
      %c0_11 = arith.constant 0 : index
      %12 = vector.load %arg6[%c0_10, %c0_11] : memref<16x20xf32, #tpu.memory_space<vmem>>, vector<16x20xf32>
      %c0_12 = arith.constant 0 : index
      %c0_13 = arith.constant 0 : index
      %13 = vector.load %arg7[%c0_12, %c0_13] : memref<128x20xf32, #tpu.memory_space<vmem>>, vector<128x20xf32>
      %cst_14 = arith.constant dense<0.000000e+00> : vector<16x128xf32>
      %14 = tpu.matmul %12, %13, %cst_14 {dimension_numbers = #tpu.dot_dimension_numbers<[1], [1], [0], [0], [0, 0, 1, 0], [], []>} : vector<16x20xf32>, vector<128x20xf32>, vector<16x128xf32> -> vector<16x128xf32>
      %c0_15 = arith.constant 0 : index
      %c0_16 = arith.constant 0 : index
      %15 = vector.load %arg9[%c0_15, %c0_16] : memref<16x128xf32, #tpu.memory_space<vmem>>, vector<16x128xf32>
      %c0_17 = arith.constant 0 : index
      %c0_18 = arith.constant 0 : index
      %16 = vector.load %arg5[%c0_17, %c0_18] : memref<1x128xf32, #tpu.memory_space<vmem>>, vector<1x128xf32>
      %17 = vector.broadcast %16 : vector<1x128xf32> to vector<16x128xf32>
      %18 = arith.addf %15, %17 : vector<16x128xf32>
      %19 = arith.addf %18, %14 : vector<16x128xf32>
      %c0_19 = arith.constant 0 : index
      %c0_20 = arith.constant 0 : index
      %20 = vector.load %arg8[%c0_19, %c0_20] : memref<16x128xf32, #tpu.memory_space<vmem>>, vector<16x128xf32>
      tpu.vector_store %arg8[%c0_19, %c0_20], %19 {strides = array<i32>} : memref<16x128xf32, #tpu.memory_space<vmem>>, vector<16x128xf32>,
    } else {
    }
    return
  }
  func.func @transform_0(%arg0: i32, %arg1: i32, %arg2: i32) -> (i32, i32) {
    %c0_i32 = arith.constant 0 : i32
    return %arg1, %arg2 : i32, i32
  }
  func.func @transform_1(%arg0: i32, %arg1: i32, %arg2: i32) -> (i32, i32) {
    %c0_i32 = arith.constant 0 : i32
    return %arg0, %arg2 : i32, i32
  }
  func.func @transform_2(%arg0: i32, %arg1: i32, %arg2: i32) -> (i32, i32) {
    %c0_i32 = arith.constant 0 : i32
    %c0_i32_0 = arith.constant 0 : i32
    return %c0_i32, %arg0 : i32, i32
  }
  func.func @transform_3(%arg0: i32, %arg1: i32, %arg2: i32) -> (i32, i32) {
    %c0_i32 = arith.constant 0 : i32
    %c0_i32_0 = arith.constant 0 : i32
    return %arg1, %c0_i32 : i32, i32
  }
  func.func @transform_4(%arg0: i32, %arg1: i32, %arg2: i32) -> (i32, i32) {
    %c0_i32 = arith.constant 0 : i32
    %c0_i32_0 = arith.constant 0 : i32
    return %arg0, %c0_i32 : i32, i32
  }
  func.func @transform_5(%arg0: i32, %arg1: i32, %arg2: i32) -> (i32, i32) {
    %c0_i32 = arith.constant 0 : i32
    return %arg1, %arg0 : i32, i32
  }
}

</mosaic_0001>

<llo_original>
// kernel: tpu_custom_call.1
$region0: #{tpu_custom_call.1}
  #allocation0 [shape = 'u32[]', space=smem, size = 0x4, offset = 0x4, fixed_abs, tag = 'smem constant byte address 0x4 - core index']
  #allocation1 [shape = 'u32[144,128]{1,0:T(1,128)}', space=vmem, size = 0x12000, scoped, tag = 'internal scratch']
  #allocation2 [shape = 'f32[16,128]{1,0:T(8,128)}', space=vmem, size = 0x2000, scoped, tag = 'scratch operand']
  %s0 = inlined_call_operand.vmem [shape: f32[16,32], index: 0, kind: input, shape index: {}]
  %s1 = inlined_call_operand.vmem [shape: f32[128,32], index: 1, kind: input, shape index: {}]
  %s2 = inlined_call_operand.vmem [shape: f32[1,128], index: 2, kind: input, shape index: {}]
  %s3 = inlined_call_operand.vmem [shape: f32[16,20], index: 3, kind: input, shape index: {}]
  %s4 = inlined_call_operand.vmem [shape: f32[128,20], index: 4, kind: input, shape index: {}]
  %s5 = inlined_call_operand.hbm [shape: f32[16,128], index: 5, kind: output, shape index: {}]
  %s6 = sld [smem:[#allocation0]]
  $region38: #{tpu_custom_call.1} parent=0
    _
  %s8 = ssub.s32 1, %s6
  %s9 = scalar_select 0, %s8, %s6
  $region1: #{tpu_custom_call.1} parent=0
    #allocation3 [shape = 'u8[8192]{0}', space=vmem, size = 0x2000, scoped, tag = 'output window, operand 0, single buffered']
    #allocation4 [shape = 's32[1]{0}', space=sflag, size = 0x4, scoped, tag = 'scoped memory for tpu_custom_call.1']
    %10 = vsyncpa [#allocation4], 0
    // Predicated region
    $region2: #{tpu_custom_call.1} parent=1 // pred_check
      _
    $region3: #{tpu_custom_call.1} parent=1 // pred_check_branch
      %12 = sbr.rel (0) target = $region5
    $region4: #{tpu_custom_call.1} parent=1 // pred_region
      _
    $region5: #{tpu_custom_call.1} parent=1 // pred_fallthru
      _
    // Predicated region
    $region6: #{tpu_custom_call.1} parent=1 // pred_check
      _
    $region7: #{tpu_custom_call.1} parent=1 // pred_check_branch
      %14 = sbr.rel (0) target = $region9
    $region8: #{tpu_custom_call.1} parent=1 // pred_region
      _
    $region9: #{tpu_custom_call.1} parent=1 // pred_fallthru
      _
    // Predicated region
    $region10: #{tpu_custom_call.1} parent=1 // pred_check
      _
    $region11: #{tpu_custom_call.1} parent=1 // pred_check_branch
      %16 = sbr.rel (0) target = $region13
    $region12: #{tpu_custom_call.1} parent=1 // pred_region
      _
    $region13: #{tpu_custom_call.1} parent=1 // pred_fallthru
      _
    // Predicated region
    $region14: #{tpu_custom_call.1} parent=1 // pred_check
      _
    $region15: #{tpu_custom_call.1} parent=1 // pred_check_branch
      %18 = sbr.rel (0) target = $region17
    $region16: #{tpu_custom_call.1} parent=1 // pred_region
      _
    $region17: #{tpu_custom_call.1} parent=1 // pred_fallthru
      _
    // Predicated region
    $region18: #{tpu_custom_call.1} parent=1 // pred_check
      _
    $region19: #{tpu_custom_call.1} parent=1 // pred_check_branch
      %20 = sbr.rel (0) target = $region21
    $region20: #{tpu_custom_call.1} parent=1 // pred_region
      _
    $region21: #{tpu_custom_call.1} parent=1 // pred_fallthru
      _
    %p21 = scmp.eq.s32.totalorder 0, 0
    // Predicated region
    $region22: #{tpu_custom_call.1} parent=1 // pred_check
      %p22 = pneg %p21
    $region23: #{tpu_custom_call.1} parent=1 // pred_check_branch
      %24 = sbr.rel (%p22) target = $region25
    $region24: #{tpu_custom_call.1} parent=1 // pred_region
      %25 = vst [vmem:[#allocation2] sm:$0xff] 0.0
      %26 = vst [vmem:[#allocation2 + $0x8] sm:$0xff] 0.0
    $region25: #{tpu_custom_call.1} parent=1 // pred_fallthru
      _
    %v27 = vld [vmem:[#allocation2] sm:$0xff]
    %v28 = vld [vmem:[#allocation2 + $0x8] sm:$0xff]
    %v29 = vld [vmem:[%s0] sm:$0xff]
    %v30 = vld [vmem:[%s0 + $0x8] sm:$0xff]
    %v31 = vld [vmem:[%s1] sm:$0xff]
    %v32 = vld [vmem:[%s1 + $0x8] sm:$0xff]
    %v33 = vld [vmem:[%s1 + $0x10] sm:$0xff]
    %v34 = vld [vmem:[%s1 + $0x18] sm:$0xff]
    %v35 = vld [vmem:[%s1 + $0x20] sm:$0xff]
    %v36 = vld [vmem:[%s1 + $0x28] sm:$0xff]
    %v37 = vld [vmem:[%s1 + $0x30] sm:$0xff]
    %v38 = vld [vmem:[%s1 + $0x38] sm:$0xff]
    %v39 = vld [vmem:[%s1 + $0x40] sm:$0xff]
    %v40 = vld [vmem:[%s1 + $0x48] sm:$0xff]
    %v41 = vld [vmem:[%s1 + $0x50] sm:$0xff]
    %v42 = vld [vmem:[%s1 + $0x58] sm:$0xff]
    %v43 = vld [vmem:[%s1 + $0x60] sm:$0xff]
    %v44 = vld [vmem:[%s1 + $0x68] sm:$0xff]
    %v45 = vld [vmem:[%s1 + $0x70] sm:$0xff]
    %v46 = vld [vmem:[%s1 + $0x78] sm:$0xff]
    %vm47 = vcmask 261120
    %v49 = vsel %vm47, %v29, 0
    %v52 = vsel %vm47, %v30, 0
    %v55 = vsel %vm47, %v31, 0
    %v58 = vsel %vm47, %v32, 0
    %v61 = vsel %vm47, %v33, 0
    %v64 = vsel %vm47, %v34, 0
    %v67 = vsel %vm47, %v35, 0
    %v70 = vsel %vm47, %v36, 0
    %v73 = vsel %vm47, %v37, 0
    %v76 = vsel %vm47, %v38, 0
    %v79 = vsel %vm47, %v39, 0
    %v82 = vsel %vm47, %v40, 0
    %v85 = vsel %vm47, %v41, 0
    %v88 = vsel %vm47, %v42, 0
    %v91 = vsel %vm47, %v43, 0
    %v94 = vsel %vm47, %v44, 0
    %v97 = vsel %vm47, %v45, 0
    %v100 = vsel %vm47, %v46, 0
    %102 = vmatprep.subr.mxu0 0.0
    %103 = vmatpush1.xpose.msra.mxu0 %v55
    %104 = vmatprep.subr.mxu0 0.0
    %105 = vmatpush1.xpose.msra.mxu0 %v58
    %106 = vmatprep.subr.mxu0 0.0
    %107 = vmatpush1.xpose.msra.mxu0 %v61
    %108 = vmatprep.subr.mxu0 0.0
    %109 = vmatpush1.xpose.msra.mxu0 %v64
    %110 = vmatprep.subr.mxu0 0.0
    %111 = vmatpush1.xpose.msra.mxu0 %v67
    %112 = vmatprep.subr.mxu0 0.0
    %113 = vmatpush1.xpose.msra.mxu0 %v70
    %114 = vmatprep.subr.mxu0 0.0
    %115 = vmatpush1.xpose.msra.mxu0 %v73
    %116 = vmatprep.subr.mxu0 0.0
    %117 = vmatpush1.xpose.msra.mxu0 %v76
    %118 = vmatprep.subr.mxu0 0.0
    %119 = vmatpush1.xpose.msra.mxu0 %v79
    %120 = vmatprep.subr.mxu0 0.0
    %121 = vmatpush1.xpose.msra.mxu0 %v82
    %122 = vmatprep.subr.mxu0 0.0
    %123 = vmatpush1.xpose.msra.mxu0 %v85
    %124 = vmatprep.subr.mxu0 0.0
    %125 = vmatpush1.xpose.msra.mxu0 %v88
    %126 = vmatprep.subr.mxu0 0.0
    %127 = vmatpush1.xpose.msra.mxu0 %v91
    %128 = vmatprep.subr.mxu0 0.0
    %129 = vmatpush1.xpose.msra.mxu0 %v94
    %130 = vmatprep.subr.mxu0 0.0
    %131 = vmatpush1.xpose.msra.mxu0 %v97
    %132 = vmatprep.subr.mxu0 0.0
    %133 = vmatpush1.xpose.msra.mxu0 %v100
    %134 = vmatprep.subr.mxu0 0.0
    %135 = vmatpush1.xpose.msra.mxu0 0.0
    %136 = vmatprep.subr.mxu0 0.0
    %137 = vmatpush1.xpose.msra.mxu0 0.0
    %138 = vmatprep.subr.mxu0 0.0
    %139 = vmatpush1.xpose.msra.mxu0 0.0
    %140 = vmatprep.subr.mxu0 0.0
    %141 = vmatpush1.xpose.msra.mxu0 0.0
    %142 = vmatprep.subr.mxu0 0.0
    %143 = vmatpush1.xpose.msra.mxu0 0.0
    %144 = vmatprep.subr.mxu0 0.0
    %145 = vmatpush1.xpose.msra.mxu0 0.0
    %146 = vmatprep.subr.mxu0 0.0
    %147 = vmatpush1.xpose.msra.mxu0 0.0
    %148 = vmatprep.subr.mxu0 0.0
    %149 = vmatpush1.xpose.msra.mxu0 0.0
    %150 = vmatprep.subr.mxu0 0.0
    %151 = vmatpush1.xpose.msra.mxu0 0.0
    %152 = vmatprep.subr.mxu0 0.0
    %153 = vmatpush1.xpose.msra.mxu0 0.0
    %154 = vmatprep.subr.mxu0 0.0
    %155 = vmatpush1.xpose.msra.mxu0 0.0
    %156 = vmatprep.subr.mxu0 0.0
    %157 = vmatpush1.xpose.msra.mxu0 0.0
    %158 = vmatprep.subr.mxu0 0.0
    %159 = vmatpush1.xpose.msra.mxu0 0.0
    %160 = vmatprep.subr.mxu0 0.0
    %161 = vmatpush1.xpose.msra.mxu0 0.0
    %162 = vmatprep.subr.mxu0 0.0
    %163 = vmatpush1.xpose.msra.mxu0 0.0
    %164 = vmatprep.subr.mxu0 0.0
    %165 = vmatpush1.xpose.msra.mxu0 0.0
    %166 = vmatprep.mubr.f32.mxu0 0.0
    %167 = vmatmul.mubr.f32.gmra.mrb[0].mxu0 %v49
    %v168 = vpop.f32.mrb[0].mxu0
    %v169 = vadd.f32 0.0, %v168
    %v170 = vpop.f32.mrb[0].mxu0
    %171 = vmatprep.mubr.f32.mxu0 0.0
    %172 = vmatmul.mubr.f32.gmra.mrb[0].mxu0 %v52
    %v173 = vpop.f32.mrb[0].mxu0
    %v174 = vadd.f32 0.0, %v173
    %v175 = vpop.f32.mrb[0].mxu0
    %176 = vdwg.mxu0
    %v177 = vadd.f32 %v27, %v169
    %v178 = vadd.f32 %v28, %v174
    %179 = vst [vmem:[#allocation2] sm:$0xff] %v177
    %180 = vst [vmem:[#allocation2 + $0x8] sm:$0xff] %v178
    // Predicated region
    $region26: #{tpu_custom_call.1} parent=1 // pred_check
      %p181 = pneg %p21
    $region27: #{tpu_custom_call.1} parent=1 // pred_check_branch
      %183 = sbr.rel (%p181) target = $region29
    $region28: #{tpu_custom_call.1} parent=1 // pred_region
      %v184 = vld [vmem:[%s3] sm:$0xff]
      %v185 = vld [vmem:[%s3 + $0x8] sm:$0xff]
      %v186 = vld [vmem:[%s4] sm:$0xff]
      %v187 = vld [vmem:[%s4 + $0x8] sm:$0xff]
      %v188 = vld [vmem:[%s4 + $0x10] sm:$0xff]
      %v189 = vld [vmem:[%s4 + $0x18] sm:$0xff]
      %v190 = vld [vmem:[%s4 + $0x20] sm:$0xff]
      %v191 = vld [vmem:[%s4 + $0x28] sm:$0xff]
      %v192 = vld [vmem:[%s4 + $0x30] sm:$0xff]
      %v193 = vld [vmem:[%s4 + $0x38] sm:$0xff]
      %v194 = vld [vmem:[%s4 + $0x40] sm:$0xff]
      %v195 = vld [vmem:[%s4 + $0x48] sm:$0xff]
      %v196 = vld [vmem:[%s4 + $0x50] sm:$0xff]
      %v197 = vld [vmem:[%s4 + $0x58] sm:$0xff]
      %v198 = vld [vmem:[%s4 + $0x60] sm:$0xff]
      %v199 = vld [vmem:[%s4 + $0x68] sm:$0xff]
      %v200 = vld [vmem:[%s4 + $0x70] sm:$0xff]
      %v201 = vld [vmem:[%s4 + $0x78] sm:$0xff]
      %vm202 = vcmask 162816
      %v204 = vsel %vm202, %v184, 0
      %v207 = vsel %vm202, %v185, 0
      %v210 = vsel %vm202, %v186, 0
      %v213 = vsel %vm202, %v187, 0
      %v216 = vsel %vm202, %v188, 0
      %v219 = vsel %vm202, %v189, 0
      %v222 = vsel %vm202, %v190, 0
      %v225 = vsel %vm202, %v191, 0
      %v228 = vsel %vm202, %v192, 0
      %v231 = vsel %vm202, %v193, 0
      %v234 = vsel %vm202, %v194, 0
      %v237 = vsel %vm202, %v195, 0
      %v240 = vsel %vm202, %v196, 0
      %v243 = vsel %vm202, %v197, 0
      %v246 = vsel %vm202, %v198, 0
      %v249 = vsel %vm202, %v199, 0
      %v252 = vsel %vm202, %v200, 0
      %v255 = vsel %vm202, %v201, 0
      %257 = vmatprep.subr.mxu0 0.0
      %258 = vmatpush1.xpose.msra.mxu0 %v210
      %259 = vmatprep.subr.mxu0 0.0
      %260 = vmatpush1.xpose.msra.mxu0 %v213
      %261 = vmatprep.subr.mxu0 0.0
      %262 = vmatpush1.xpose.msra.mxu0 %v216
      %263 = vmatprep.subr.mxu0 0.0
      %264 = vmatpush1.xpose.msra.mxu0 %v219
      %265 = vmatprep.subr.mxu0 0.0
      %266 = vmatpush1.xpose.msra.mxu0 %v222
      %267 = vmatprep.subr.mxu0 0.0
      %268 = vmatpush1.xpose.msra.mxu0 %v225
      %269 = vmatprep.subr.mxu0 0.0
      %270 = vmatpush1.xpose.msra.mxu0 %v228
      %271 = vmatprep.subr.mxu0 0.0
      %272 = vmatpush1.xpose.msra.mxu0 %v231
      %273 = vmatprep.subr.mxu0 0.0
      %274 = vmatpush1.xpose.msra.mxu0 %v234
      %275 = vmatprep.subr.mxu0 0.0
      %276 = vmatpush1.xpose.msra.mxu0 %v237
      %277 = vmatprep.subr.mxu0 0.0
      %278 = vmatpush1.xpose.msra.mxu0 %v240
      %279 = vmatprep.subr.mxu0 0.0
      %280 = vmatpush1.xpose.msra.mxu0 %v243
      %281 = vmatprep.subr.mxu0 0.0
      %282 = vmatpush1.xpose.msra.mxu0 %v246
      %283 = vmatprep.subr.mxu0 0.0
      %284 = vmatpush1.xpose.msra.mxu0 %v249
      %285 = vmatprep.subr.mxu0 0.0
      %286 = vmatpush1.xpose.msra.mxu0 %v252
      %287 = vmatprep.subr.mxu0 0.0
      %288 = vmatpush1.xpose.msra.mxu0 %v255
      %289 = vmatprep.subr.mxu0 0.0
      %290 = vmatpush1.xpose.msra.mxu0 0.0
      %291 = vmatprep.subr.mxu0 0.0
      %292 = vmatpush1.xpose.msra.mxu0 0.0
      %293 = vmatprep.subr.mxu0 0.0
      %294 = vmatpush1.xpose.msra.mxu0 0.0
      %295 = vmatprep.subr.mxu0 0.0
      %296 = vmatpush1.xpose.msra.mxu0 0.0
      %297 = vmatprep.subr.mxu0 0.0
      %298 = vmatpush1.xpose.msra.mxu0 0.0
      %299 = vmatprep.subr.mxu0 0.0
      %300 = vmatpush1.xpose.msra.mxu0 0.0
      %301 = vmatprep.subr.mxu0 0.0
      %302 = vmatpush1.xpose.msra.mxu0 0.0
      %303 = vmatprep.subr.mxu0 0.0
      %304 = vmatpush1.xpose.msra.mxu0 0.0
      %305 = vmatprep.subr.mxu0 0.0
      %306 = vmatpush1.xpose.msra.mxu0 0.0
      %307 = vmatprep.subr.mxu0 0.0
      %308 = vmatpush1.xpose.msra.mxu0 0.0
      %309 = vmatprep.subr.mxu0 0.0
      %310 = vmatpush1.xpose.msra.mxu0 0.0
      %311 = vmatprep.subr.mxu0 0.0
      %312 = vmatpush1.xpose.msra.mxu0 0.0
      %313 = vmatprep.subr.mxu0 0.0
      %314 = vmatpush1.xpose.msra.mxu0 0.0
      %315 = vmatprep.subr.mxu0 0.0
      %316 = vmatpush1.xpose.msra.mxu0 0.0
      %317 = vmatprep.subr.mxu0 0.0
      %318 = vmatpush1.xpose.msra.mxu0 0.0
      %319 = vmatprep.subr.mxu0 0.0
      %320 = vmatpush1.xpose.msra.mxu0 0.0
      %321 = vmatprep.mubr.f32.mxu0 0.0
      %322 = vmatmul.mubr.f32.gmra.mrb[0].mxu0 %v204
      %v323 = vpop.f32.mrb[0].mxu0
      %v324 = vadd.f32 0.0, %v323
      %v325 = vpop.f32.mrb[0].mxu0
      %326 = vmatprep.mubr.f32.mxu0 0.0
      %327 = vmatmul.mubr.f32.gmra.mrb[0].mxu0 %v207
      %v328 = vpop.f32.mrb[0].mxu0
      %v329 = vadd.f32 0.0, %v328
      %v330 = vpop.f32.mrb[0].mxu0
      %331 = vdwg.mxu0
      %v332 = vld [vmem:[#allocation2] sm:$0xff]
      %v333 = vld [vmem:[#allocation2 + $0x8] sm:$0xff]
      %v334 = vld [vmem:[%s2] sm:$0x1]
      %v336 = vlaneseq
      %v337 = vshrl.u32 %v336, 7
      %v338 = vsub.s32 0, %v337
      %v339 = vrot.slane %v334, %v338
      %v341 = vadd.f32 %v332, %v339
      %v342 = vadd.f32 %v333, %v339
      %v343 = vadd.f32 %v341, %v324
      %v344 = vadd.f32 %v342, %v329
      %345 = vst [vmem:[#allocation3] sm:$0xff] %v343
      %346 = vst [vmem:[#allocation3 + $0x8] sm:$0xff] %v344
    $region29: #{tpu_custom_call.1} parent=1 // pred_fallthru
      _
    // Predicated region
    $region30: #{tpu_custom_call.1} parent=1 // pred_check
      _
    $region31: #{tpu_custom_call.1} parent=1 // pred_check_branch
      %348 = sbr.rel (0) target = $region33
    $region32: #{tpu_custom_call.1} parent=1 // pred_region
      %s350 = ssub.s32 256, 256
      %351 = vsyncadd [#allocation4], %s350
      %s352 = sshll.u32 [#allocation3], 4
      %s353 = int_to_ptr.vmem [resolvable:$true] %s352
      %358 = dma.vmem_to_hbm [thread:$0]  %s353, 256, %s5, [#allocation4], 128, 128, 8
    $region33: #{tpu_custom_call.1} parent=1 // pred_fallthru
      _
    // Predicated region
    $region34: #{tpu_custom_call.1} parent=1 // pred_check
      _
    $region35: #{tpu_custom_call.1} parent=1 // pred_check_branch
      %360 = sbr.rel (0) target = $region37
    $region36: #{tpu_custom_call.1} parent=1 // pred_region
      %361 = dma.done [#allocation4], 256
    $region37: #{tpu_custom_call.1} parent=1 // pred_fallthru
      _
    %362 = vsyncpa [#allocation4], 1

</llo_original>
